<compile_context>
chip_gen: v6e
topology: v6e:2x2x1
jax: 0.10.0
libtpu: 0.0.40
codegen_flags: <defaults>
</compile_context>

<pallas_src>
import jax
import jax.numpy as jnp
from jax.experimental import pallas as pl
from jax.experimental.pallas import tpu as pltpu

_SMOOTH = 1.0
_LANES = 128
_MAX_BLOCK_ROWS = 2048   # (2048,128) f32 = 1 MiB/block; safe on v5e/v6e/v7x
_NUM_CORES = 2           # leading "parallel" grid axis (exploits v7x megacore)


def _cdiv(a, b):
    return -(-a // b)


def _round_up(a, b):
    return _cdiv(a, b) * b


def _dice_partials_kernel(yt_ref, yp_ref, prod_ref, both_ref):
    # yt_ref / yp_ref : (block_rows, 128) input tile (native dtype)
    # prod_ref/both_ref: (8, 128) f32 accumulators, resident across the inner
    #                    (arbitrary) grid axis, one output block per core.
    i = pl.program_id(1)

    @pl.when(i == 0)
    def _():
        prod_ref[...] = jnp.zeros_like(prod_ref)
        both_ref[...] = jnp.zeros_like(both_ref)

    yt = yt_ref[...].astype(jnp.float32)
    yp = yp_ref[...].astype(jnp.float32)

    # Pure-VPU partial reductions: collapse the block to one (8,128) vreg-tile
    # per accumulator (reshape does not cross (8,128) tile boundaries).
    prod_ref[...] += jnp.sum((yt * yp).reshape(-1, 8, _LANES), axis=0)
    both_ref[...] += jnp.sum((yt + yp).reshape(-1, 8, _LANES), axis=0)


def dice_loss(y_true, y_pred):
    """forward() of DiceCoefficient: 1 - 2*sum(yt*yp)/(sum(yt)+sum(yp)+1). f32 scalar."""
    assert y_true.shape == y_pred.shape
    n = y_true.size

    rows_needed = max(1, _cdiv(n, _LANES))
    block_rows = min(_MAX_BLOCK_ROWS, _round_up(_cdiv(rows_needed, _NUM_CORES), 8))
    rows = _round_up(rows_needed, _NUM_CORES * block_rows)
    blocks_per_core = rows // (_NUM_CORES * block_rows)
    n_pad = rows * _LANES

    def _prep(a):
        a = jnp.ravel(a)                  # keep native dtype; cast happens in-kernel
        a = jnp.pad(a, (0, n_pad - n))    # zero pad: does not perturb any sum
        return a.reshape(rows, _LANES)

    yt2 = _prep(y_true)
    yp2 = _prep(y_pred)

    in_map = lambda c, i: (c * blocks_per_core + i, 0)
    out_map = lambda c, i: (c, 0, 0)

    prod_p, both_p = pl.pallas_call(
        _dice_partials_kernel,
        out_shape=(
            jax.ShapeDtypeStruct((_NUM_CORES, 8, _LANES), jnp.float32),
            jax.ShapeDtypeStruct((_NUM_CORES, 8, _LANES), jnp.float32),
        ),
        grid_spec=pltpu.PrefetchScalarGridSpec(
            num_scalar_prefetch=0,
            grid=(_NUM_CORES, blocks_per_core),
            in_specs=[
                pl.BlockSpec((block_rows, _LANES), in_map),
                pl.BlockSpec((block_rows, _LANES), in_map),
            ],
            out_specs=[
                pl.BlockSpec((None, 8, _LANES), out_map),
                pl.BlockSpec((None, 8, _LANES), out_map),
            ],
        ),
        compiler_params=pltpu.CompilerParams(
            dimension_semantics=("parallel", "arbitrary"),
            allow_input_fusion=[True, True],
        ),
    )(yt2, yp2)

    # Tiny final reduction + dice formula (2 x 8 x 128 elements each).
    inter = jnp.sum(prod_p)
    s_both = jnp.sum(both_p)
    dice = 2.0 * inter / (s_both + _SMOOTH)
    return (1.0 - dice).astype(jnp.float32)


def dice_loss_ref(y_true, y_pred):
    yt = jnp.ravel(y_true).astype(jnp.float32)
    yp = jnp.ravel(y_pred).astype(jnp.float32)
    return 1.0 - 2.0 * jnp.sum(yt * yp) / (jnp.sum(yt) + jnp.sum(yp) + _SMOOTH)


if __name__ == "__main__":
    key = jax.random.PRNGKey(0)
    k1, k2 = jax.random.split(key)
    # NCHW: batch=2, channels=4, spatial=16x16
    y_true = (jax.random.uniform(k1, (2, 4, 16, 16)) > 0.5).astype(jnp.float32)
    y_pred = jax.random.uniform(k2, (2, 4, 16, 16), dtype=jnp.float32)

    out = jax.block_until_ready(jax.jit(dice_loss)(y_true, y_pred))
    ref = jax.block_until_ready(dice_loss_ref(y_true, y_pred))

    assert jnp.allclose(out, ref, rtol=1e-5, atol=1e-5), (out, ref)
    print("KERNEL_OK")
</pallas_src>

<mosaic_0001>
module attributes {stable_mosaic.version = 11 : i64} {
  func.func @_dice_partials_kernel(%arg0: i32, %arg1: i32, %arg2: memref<8x128xf32, #tpu.memory_space<vmem>>, %arg3: memref<8x128xf32, #tpu.memory_space<vmem>>, %arg4: memref<1x8x128xf32, #tpu.memory_space<vmem>>, %arg5: memref<1x8x128xf32, #tpu.memory_space<vmem>>) attributes {dimension_semantics = [#tpu.dimension_semantics<parallel>, #tpu.dimension_semantics<arbitrary>], iteration_bounds = array<i64: 2, 1>, scalar_prefetch = 0 : i64, scratch_operands = 0 : i64, tpu.core_type = #tpu.core_type<tc>, window_params = [{transform_indices = @transform_0, window_bounds = array<i64: 8, 128>}, {transform_indices = @transform_1, window_bounds = array<i64: 8, 128>}, {transform_indices = @transform_2, window_bounds = array<i64: 1, 8, 128>}, {transform_indices = @transform_3, window_bounds = array<i64: 1, 8, 128>}]} {
    %c0_i32 = arith.constant 0 : i32
    %0 = arith.cmpi eq, %arg1, %c0_i32 : i32
    %1 = arith.extui %0 : i1 to i32
    %c0_i32_0 = arith.constant 0 : i32
    %2 = arith.cmpi ne, %1, %c0_i32_0 : i32
    scf.if %2 {
      %cst_17 = arith.constant 0.000000e+00 : f32
      %23 = vector.broadcast %cst_17 : f32 to vector<8x128xf32>
      %c0_18 = arith.constant 0 : index
      %c0_19 = arith.constant 0 : index
      %c0_20 = arith.constant 0 : index
      %24 = vector.load %arg4[%c0_18, %c0_19, %c0_20] : memref<1x8x128xf32, #tpu.memory_space<vmem>>, vector<1x8x128xf32>
      %25 = vector.shape_cast %24 : vector<1x8x128xf32> to vector<8x128xf32>
      %26 = vector.shape_cast %23 : vector<8x128xf32> to vector<1x8x128xf32>
      tpu.vector_store %arg4[%c0_18, %c0_19, %c0_20], %26 {strides = array<i32>} : memref<1x8x128xf32, #tpu.memory_space<vmem>>, vector<1x8x128xf32>,
      %cst_21 = arith.constant 0.000000e+00 : f32
      %27 = vector.broadcast %cst_21 : f32 to vector<8x128xf32>
      %c0_22 = arith.constant 0 : index
      %c0_23 = arith.constant 0 : index
      %c0_24 = arith.constant 0 : index
      %28 = vector.load %arg5[%c0_22, %c0_23, %c0_24] : memref<1x8x128xf32, #tpu.memory_space<vmem>>, vector<1x8x128xf32>
      %29 = vector.shape_cast %28 : vector<1x8x128xf32> to vector<8x128xf32>
      %30 = vector.shape_cast %27 : vector<8x128xf32> to vector<1x8x128xf32>
      tpu.vector_store %arg5[%c0_22, %c0_23, %c0_24], %30 {strides = array<i32>} : memref<1x8x128xf32, #tpu.memory_space<vmem>>, vector<1x8x128xf32>,
    } else {
    }
    %c0 = arith.constant 0 : index
    %c0_1 = arith.constant 0 : index
    %3 = vector.load %arg2[%c0, %c0_1] : memref<8x128xf32, #tpu.memory_space<vmem>>, vector<8x128xf32>
    %c0_2 = arith.constant 0 : index
    %c0_3 = arith.constant 0 : index
    %4 = vector.load %arg3[%c0_2, %c0_3] : memref<8x128xf32, #tpu.memory_space<vmem>>, vector<8x128xf32>
    %c0_4 = arith.constant 0 : index
    %c0_5 = arith.constant 0 : index
    %c0_6 = arith.constant 0 : index
    %5 = vector.load %arg4[%c0_4, %c0_5, %c0_6] : memref<1x8x128xf32, #tpu.memory_space<vmem>>, vector<1x8x128xf32>
    %6 = vector.shape_cast %5 : vector<1x8x128xf32> to vector<8x128xf32>
    %7 = arith.mulf %3, %4 : vector<8x128xf32>
    %8 = vector.shape_cast %7 : vector<8x128xf32> to vector<1x8x128xf32>
    %cst = arith.constant dense<0.000000e+00> : vector<8x128xf32>
    %9 = vector.multi_reduction <add>, %8, %cst [0] : vector<1x8x128xf32> to vector<8x128xf32>
    %10 = arith.addf %6, %9 : vector<8x128xf32>
    %c0_7 = arith.constant 0 : index
    %c0_8 = arith.constant 0 : index
    %c0_9 = arith.constant 0 : index
    %11 = vector.load %arg4[%c0_7, %c0_8, %c0_9] : memref<1x8x128xf32, #tpu.memory_space<vmem>>, vector<1x8x128xf32>
    %12 = vector.shape_cast %11 : vector<1x8x128xf32> to vector<8x128xf32>
    %13 = vector.shape_cast %10 : vector<8x128xf32> to vector<1x8x128xf32>
    tpu.vector_store %arg4[%c0_7, %c0_8, %c0_9], %13 {strides = array<i32>} : memref<1x8x128xf32, #tpu.memory_space<vmem>>, vector<1x8x128xf32>,
    %c0_10 = arith.constant 0 : index
    %c0_11 = arith.constant 0 : index
    %c0_12 = arith.constant 0 : index
    %14 = vector.load %arg5[%c0_10, %c0_11, %c0_12] : memref<1x8x128xf32, #tpu.memory_space<vmem>>, vector<1x8x128xf32>
    %15 = vector.shape_cast %14 : vector<1x8x128xf32> to vector<8x128xf32>
    %16 = arith.addf %3, %4 : vector<8x128xf32>
    %17 = vector.shape_cast %16 : vector<8x128xf32> to vector<1x8x128xf32>
    %cst_13 = arith.constant dense<0.000000e+00> : vector<8x128xf32>
    %18 = vector.multi_reduction <add>, %17, %cst_13 [0] : vector<1x8x128xf32> to vector<8x128xf32>
    %19 = arith.addf %15, %18 : vector<8x128xf32>
    %c0_14 = arith.constant 0 : index
    %c0_15 = arith.constant 0 : index
    %c0_16 = arith.constant 0 : index
    %20 = vector.load %arg5[%c0_14, %c0_15, %c0_16] : memref<1x8x128xf32, #tpu.memory_space<vmem>>, vector<1x8x128xf32>
    %21 = vector.shape_cast %20 : vector<1x8x128xf32> to vector<8x128xf32>
    %22 = vector.shape_cast %19 : vector<8x128xf32> to vector<1x8x128xf32>
    tpu.vector_store %arg5[%c0_14, %c0_15, %c0_16], %22 {strides = array<i32>} : memref<1x8x128xf32, #tpu.memory_space<vmem>>, vector<1x8x128xf32>,
    return
  }
  func.func @transform_0(%arg0: i32, %arg1: i32) -> (i32, i32) {
    %c1_i32 = arith.constant 1 : i32
    %0 = arith.muli %arg0, %c1_i32 : i32
    %1 = arith.addi %0, %arg1 : i32
    %c0_i32 = arith.constant 0 : i32
    %c0_i32_0 = arith.constant 0 : i32
    return %1, %c0_i32 : i32, i32
  }
  func.func @transform_1(%arg0: i32, %arg1: i32) -> (i32, i32) {
    %c1_i32 = arith.constant 1 : i32
    %0 = arith.muli %arg0, %c1_i32 : i32
    %1 = arith.addi %0, %arg1 : i32
    %c0_i32 = arith.constant 0 : i32
    %c0_i32_0 = arith.constant 0 : i32
    return %1, %c0_i32 : i32, i32
  }
  func.func @transform_2(%arg0: i32, %arg1: i32) -> (i32, i32, i32) {
    %c0_i32 = arith.constant 0 : i32
    %c0_i32_0 = arith.constant 0 : i32
    %c0_i32_1 = arith.constant 0 : i32
    return %arg0, %c0_i32, %c0_i32_0 : i32, i32, i32
  }
  func.func @transform_3(%arg0: i32, %arg1: i32) -> (i32, i32, i32) {
    %c0_i32 = arith.constant 0 : i32
    %c0_i32_0 = arith.constant 0 : i32
    %c0_i32_1 = arith.constant 0 : i32
    return %arg0, %c0_i32, %c0_i32_0 : i32, i32, i32
  }
}

</mosaic_0001>

<llo_original>
// kernel: dice_loss.1
$region0: #{dice_loss.1}
  #allocation0 [shape = 'u32[]', space=smem, size = 0x4, offset = 0x4, fixed_abs, tag = 'smem constant byte address 0x4 - core index']
  #allocation1 [shape = 'u32[144,128]{1,0:T(1,128)}', space=vmem, size = 0x12000, scoped, tag = 'internal scratch']
  %s0 = inlined_call_operand.vmem [shape: f32[16,128], index: 0, kind: input, shape index: {}]
  %s1 = inlined_call_operand.vmem [shape: f32[16,128], index: 1, kind: input, shape index: {}]
  %s2 = inlined_call_operand.vmem [shape: f32[2,8,128], index: 2, kind: output, shape index: {0}]
  %s3 = inlined_call_operand.vmem [shape: f32[2,8,128], index: 3, kind: output, shape index: {1}]
  %4 = xla_tuple %s2, %s3
  %s5 = sld [smem:[#allocation0]]
  $region53: #{dice_loss.1} parent=0
    _
  %s7 = ssub.s32 1, %s5
  %s8 = scalar_select 0, %s7, %s5
  loop: start=0, step=1, limit=4
  $region2: #{dice_loss.1} parent=0 // loop_pre_header
    _
  $region3: #{dice_loss.1} parent=0 // loop_header
    %s10 = sphi 0, %s14
    %p11 = scmp.ge.s32.totalorder %s10, 4
    %s17 = sphi 0, %s29
    %s18 = sphi 0, %s25
    %s19 = sphi 0, %s17
    %s20 = sphi 0, %s18
    %s21 = sphi 0, %s19
    %s22 = sphi 0, %s20
    %s34 = sphi 0, %s36
    %s37 = sphi 0, %s34
    %s38 = sphi 0, %s37
    %s54 = sphi 0, %s38
    %s62 = sphi 0, %s64
    %s65 = sphi 0, %s62
    %s66 = sphi 0, %s65
    %s82 = sphi 0, %s66
    %s88 = sphi 0, %s90
    %s91 = sphi 0, %s88
    %s92 = sphi 0, %s91
    %s108 = sphi 0, %s92
    %s114 = sphi 0, %s116
    %s117 = sphi 0, %s114
    %s118 = sphi 0, %s117
    %s134 = sphi 0, %s118
  $region4: #{dice_loss.1} parent=0 // loop_header_branch
    %13 = sbr.rel (%p11) target = $region8
  $region5: #{dice_loss.1} parent=0 // loop_body
    %s15 = ssub.s32 %s10, 1
    %s16 = ssub.s32 %s10, 2
    %s23 = sadd.s32 1, %s18
    %p24 = scmp.ge.s32.totalorder %s23, 1
    %s25 = scalar_select %p24, 0, %s23
    %s26 = sadd.s32 1, %s17
    %s27 = scalar_select %p24, %s26, %s17
    %p28 = scmp.ge.s32.totalorder %s27, 2
    %s29 = scalar_select %p28, 0, %s27
    %s30 = sadd.s32 %s17, %s18
    %s31 = sadd.s32 %s29, %s25
    %s32 = ssub.s32 %s30, %s31
    %p33 = scmp.eq.s32.totalorder %s32, 0
    %s35 = sadd.s32 %s34, 1
    %s36 = scalar_select %p33, %s34, %s35
    %p39 = pneg %p33
    %p40 = scmp.eq.s32.totalorder %s10, 1
    %p41 = por %p39, %p40
    %p42 = scmp.ne.s32.totalorder %s34, %s37
    %p43 = scmp.eq.s32.totalorder %s10, 0
    %p44 = por %p42, %p43
    %p45 = scmp.ne.s32.totalorder %s34, %s37
    %p46 = scmp.eq.s32.totalorder %s15, 1
    %p47 = por %p45, %p46
    %p48 = scmp.ne.s32.totalorder %s37, %s38
    %p49 = scmp.eq.s32.totalorder %s15, 0
    %p50 = por %p48, %p49
    %p51 = scmp.ne.s32.totalorder %s37, %s38
    %p52 = scmp.eq.s32.totalorder %s16, 1
    %p53 = por %p51, %p52
    %p55 = scmp.ne.s32.totalorder %s38, %s54
    %p56 = scmp.eq.s32.totalorder %s16, 0
    %p57 = por %p55, %p56
    %s58 = sadd.s32 %s17, %s18
    %s59 = sadd.s32 %s29, %s25
    %s60 = ssub.s32 %s58, %s59
    %p61 = scmp.eq.s32.totalorder %s60, 0
    %s63 = sadd.s32 %s62, 1
    %s64 = scalar_select %p61, %s62, %s63
    %p67 = pneg %p61
    %p68 = scmp.eq.s32.totalorder %s10, 1
    %p69 = por %p67, %p68
    %p70 = scmp.ne.s32.totalorder %s62, %s65
    %p71 = scmp.eq.s32.totalorder %s10, 0
    %p72 = por %p70, %p71
    %p73 = scmp.ne.s32.totalorder %s62, %s65
    %p74 = scmp.eq.s32.totalorder %s15, 1
    %p75 = por %p73, %p74
    %p76 = scmp.ne.s32.totalorder %s65, %s66
    %p77 = scmp.eq.s32.totalorder %s15, 0
    %p78 = por %p76, %p77
    %p79 = scmp.ne.s32.totalorder %s65, %s66
    %p80 = scmp.eq.s32.totalorder %s16, 1
    %p81 = por %p79, %p80
    %p83 = scmp.ne.s32.totalorder %s66, %s82
    %p84 = scmp.eq.s32.totalorder %s16, 0
    %p85 = por %p83, %p84
    %s86 = ssub.s32 %s17, %s29
    %p87 = scmp.eq.s32.totalorder %s86, 0
    %s89 = sadd.s32 %s88, 1
    %s90 = scalar_select %p87, %s88, %s89
    %p93 = pneg %p87
    %p94 = scmp.eq.s32.totalorder %s10, 1
    %p95 = por %p93, %p94
    %p96 = scmp.ne.s32.totalorder %s88, %s91
    %p97 = scmp.eq.s32.totalorder %s10, 0
    %p98 = por %p96, %p97
    %p99 = scmp.ne.s32.totalorder %s88, %s91
    %p100 = scmp.eq.s32.totalorder %s15, 1
    %p101 = por %p99, %p100
    %p102 = scmp.ne.s32.totalorder %s91, %s92
    %p103 = scmp.eq.s32.totalorder %s15, 0
    %p104 = por %p102, %p103
    %p105 = scmp.ne.s32.totalorder %s91, %s92
    %p106 = scmp.eq.s32.totalorder %s16, 1
    %p107 = por %p105, %p106
    %p109 = scmp.ne.s32.totalorder %s92, %s108
    %p110 = scmp.eq.s32.totalorder %s16, 0
    %p111 = por %p109, %p110
    %s112 = ssub.s32 %s17, %s29
    %p113 = scmp.eq.s32.totalorder %s112, 0
    %s115 = sadd.s32 %s114, 1
    %s116 = scalar_select %p113, %s114, %s115
    %p119 = pneg %p113
    %p120 = scmp.eq.s32.totalorder %s10, 1
    %p121 = por %p119, %p120
    %p122 = scmp.ne.s32.totalorder %s114, %s117
    %p123 = scmp.eq.s32.totalorder %s10, 0
    %p124 = por %p122, %p123
    %p125 = scmp.ne.s32.totalorder %s114, %s117
    %p126 = scmp.eq.s32.totalorder %s15, 1
    %p127 = por %p125, %p126
    %p128 = scmp.ne.s32.totalorder %s117, %s118
    %p129 = scmp.eq.s32.totalorder %s15, 0
    %p130 = por %p128, %p129
    %p131 = scmp.ne.s32.totalorder %s117, %s118
    %p132 = scmp.eq.s32.totalorder %s16, 1
    %p133 = por %p131, %p132
    %p135 = scmp.ne.s32.totalorder %s118, %s134
    %p136 = scmp.eq.s32.totalorder %s16, 0
    %p137 = por %p135, %p136
    %p138 = scmp.le.s32.totalorder 1, %s10
    %p139 = scmp.lt.s32.totalorder %s10, 3
    %p140 = pnand %p138, %p139
    %p141 = pneg %p140
    // Predicated region
    $region9: #{dice_loss.1} parent=5 // pred_check
      _
    $region10: #{dice_loss.1} parent=5 // pred_check_branch
      %143 = sbr.rel (%p140) target = $region12
    $region11: #{dice_loss.1} parent=5 // pred_region
      %s144 = ssub.s32 %s10, 1
    $region12: #{dice_loss.1} parent=5 // pred_fallthru
      _
    %p145 = scmp.lt.s32.totalorder %s10, 2
    // Predicated region
    $region13: #{dice_loss.1} parent=5 // pred_check
      %p146 = pneg %p145
    $region14: #{dice_loss.1} parent=5 // pred_check_branch
      %148 = sbr.rel (%p146) target = $region16
    $region15: #{dice_loss.1} parent=5 // pred_region
      // Predicated region
      $region17: #{dice_loss.1} parent=15 // pred_check
        %p149 = pneg %p44
      $region18: #{dice_loss.1} parent=15 // pred_check_branch
        %151 = sbr.rel (%p149) target = $region20
      $region19: #{dice_loss.1} parent=15 // pred_region
        %s152 = sadd.s32 %s17, %s18
        %p153 = scmp.lt.s32.totalorder %s152, 1
        %s154 = scalar_select %p153, %s152, 1
        %s155 = smul.addr %s154, 8
        %s156 = scalar_lea.vmem %s0, %s155
        %s157 = sadd.s32 %s17, %s18
      $region20: #{dice_loss.1} parent=15 // pred_fallthru
        _
      // Predicated region
      $region21: #{dice_loss.1} parent=15 // pred_check
        %p158 = pneg %p72
      $region22: #{dice_loss.1} parent=15 // pred_check_branch
        %160 = sbr.rel (%p158) target = $region24
      $region23: #{dice_loss.1} parent=15 // pred_region
        %s161 = sadd.s32 %s17, %s18
        %p162 = scmp.lt.s32.totalorder %s161, 1
        %s163 = scalar_select %p162, %s161, 1
        %s164 = smul.addr %s163, 8
        %s165 = scalar_lea.vmem %s1, %s164
        %s166 = sadd.s32 %s17, %s18
      $region24: #{dice_loss.1} parent=15 // pred_fallthru
        _
    $region16: #{dice_loss.1} parent=5 // pred_fallthru
      _
    %p167 = scmp.le.s32.totalorder 1, %s10
    %p168 = scmp.lt.s32.totalorder %s10, 3
    %p169 = pnand %p167, %p168
    %p170 = pneg %p169
    // Predicated region
    $region25: #{dice_loss.1} parent=5 // pred_check
      _
    $region26: #{dice_loss.1} parent=5 // pred_check_branch
      %172 = sbr.rel (%p169) target = $region28
    $region27: #{dice_loss.1} parent=5 // pred_region
      %s173 = ssub.s32 %s10, 1
      %s174 = sadd.s32 %s19, %s20
      %p175 = scmp.lt.s32.totalorder %s174, 1
      %s176 = scalar_select %p175, %s174, 1
      %s177 = smul.addr %s176, 8
      %s178 = scalar_lea.vmem %s0, %s177
      %p179 = pneg %p50
      %p180 = pneg %p47
      %s181 = sadd.s32 %s19, %s20
      %p182 = scmp.lt.s32.totalorder %s181, 1
      %s183 = scalar_select %p182, %s181, 1
      %s184 = smul.addr %s183, 8
      %s185 = scalar_lea.vmem %s1, %s184
      %p186 = pneg %p78
      %p187 = pneg %p75
      %p188 = pneg %p104
      %p189 = pneg %p101
      %p190 = scmp.lt.s32.totalorder %s19, 1
      %s191 = scalar_select %p190, %s19, 1
      %s192 = smul.addr %s191, 8
      %s193 = scalar_lea.vmem %s2, %s192
      %p194 = pneg %p130
      %p195 = pneg %p127
      %p196 = scmp.lt.s32.totalorder %s19, 1
      %s197 = scalar_select %p196, %s19, 1
      %s198 = smul.addr %s197, 8
      %s199 = scalar_lea.vmem %s3, %s198
      %s200 = sadd.s32 %s19, %s20
      %p201 = scmp.lt.s32.totalorder %s200, 1
      %s202 = scalar_select %p201, %s200, 1
      %s203 = smul.addr %s202, 8
      %s204 = scalar_lea.vmem %s0, %s203
      %s205 = sadd.s32 %s19, %s20
      %s206 = sadd.s32 %s19, %s20
      %p207 = scmp.lt.s32.totalorder %s206, 1
      %s208 = scalar_select %p207, %s206, 1
      %s209 = smul.addr %s208, 8
      %s210 = scalar_lea.vmem %s1, %s209
      %s211 = sadd.s32 %s19, %s20
      %p212 = scmp.lt.s32.totalorder %s19, 1
      %s213 = scalar_select %p212, %s19, 1
      %s214 = smul.addr %s213, 8
      %s215 = scalar_lea.vmem %s2, %s214
      %p216 = scmp.lt.s32.totalorder %s19, 1
      %s217 = scalar_select %p216, %s19, 1
      %s218 = smul.addr %s217, 8
      %s219 = scalar_lea.vmem %s3, %s218
      %p220 = scmp.eq.s32.totalorder %s20, 0
      // Predicated region
      $region29: #{dice_loss.1} parent=27 // pred_check
        %p221 = pneg %p220
      $region30: #{dice_loss.1} parent=27 // pred_check_branch
        %223 = sbr.rel (%p221) target = $region32
      $region31: #{dice_loss.1} parent=27 // pred_region
        %224 = vst [vmem:[%s215] sm:$0xff] 0.0
        %225 = vst [vmem:[%s219] sm:$0xff] 0.0
      $region32: #{dice_loss.1} parent=27 // pred_fallthru
        _
      %v226 = vld [vmem:[%s204] sm:$0xff]
      %v227 = vld [vmem:[%s210] sm:$0xff]
      %v228 = vld [vmem:[%s215] sm:$0xff]
      %v229 = vmul.f32 %v226, %v227
      %v230 = vadd.f32 %v229, 0.0
      %v231 = vadd.f32 %v228, %v230
      %232 = vst [vmem:[%s215] sm:$0xff] %v231
      %v233 = vld [vmem:[%s219] sm:$0xff]
      %v234 = vadd.f32 %v226, %v227
      %v235 = vadd.f32 %v234, 0.0
      %v236 = vadd.f32 %v233, %v235
      %237 = vst [vmem:[%s219] sm:$0xff] %v236
      %p238 = scmp.lt.s32.totalorder %s19, 1
      %s239 = scalar_select %p238, %s19, 1
      %s240 = smul.addr %s239, 8
      %s241 = scalar_lea.vmem %s2, %s240
      %p242 = scmp.lt.s32.totalorder %s19, 1
      %s243 = scalar_select %p242, %s19, 1
      %s244 = smul.addr %s243, 8
      %s245 = scalar_lea.vmem %s3, %s244
      // Predicated region
      $region33: #{dice_loss.1} parent=27 // pred_check
        %p246 = pneg %p101
      $region34: #{dice_loss.1} parent=27 // pred_check_branch
        %248 = sbr.rel (%p246) target = $region36
      $region35: #{dice_loss.1} parent=27 // pred_region
        _
      $region36: #{dice_loss.1} parent=27 // pred_fallthru
        _
      // Predicated region
      $region37: #{dice_loss.1} parent=27 // pred_check
        %p249 = pneg %p127
      $region38: #{dice_loss.1} parent=27 // pred_check_branch
        %251 = sbr.rel (%p249) target = $region40
      $region39: #{dice_loss.1} parent=27 // pred_region
        _
      $region40: #{dice_loss.1} parent=27 // pred_fallthru
        _
    $region28: #{dice_loss.1} parent=5 // pred_fallthru
      _
    %p252 = scmp.le.s32.totalorder 2, %s10
    // Predicated region
    $region41: #{dice_loss.1} parent=5 // pred_check
      %p253 = pneg %p252
    $region42: #{dice_loss.1} parent=5 // pred_check_branch
      %255 = sbr.rel (%p253) target = $region44
    $region43: #{dice_loss.1} parent=5 // pred_region
      %s256 = ssub.s32 %s10, 2
      // Predicated region
      $region45: #{dice_loss.1} parent=43 // pred_check
        %p257 = pneg %p107
      $region46: #{dice_loss.1} parent=43 // pred_check_branch
        %259 = sbr.rel (%p257) target = $region48
      $region47: #{dice_loss.1} parent=43 // pred_region
        %p260 = scmp.lt.s32.totalorder %s21, 1
        %s261 = scalar_select %p260, %s21, 1
        %s262 = smul.addr %s261, 8
        %s263 = scalar_lea.vmem %s2, %s262
      $region48: #{dice_loss.1} parent=43 // pred_fallthru
        _
      // Predicated region
      $region49: #{dice_loss.1} parent=43 // pred_check
        %p264 = pneg %p133
      $region50: #{dice_loss.1} parent=43 // pred_check_branch
        %266 = sbr.rel (%p264) target = $region52
      $region51: #{dice_loss.1} parent=43 // pred_region
        %p267 = scmp.lt.s32.totalorder %s21, 1
        %s268 = scalar_select %p267, %s21, 1
        %s269 = smul.addr %s268, 8
        %s270 = scalar_lea.vmem %s3, %s269
      $region52: #{dice_loss.1} parent=43 // pred_fallthru
        _
    $region44: #{dice_loss.1} parent=5 // pred_fallthru
      _
  $region6: #{dice_loss.1} parent=0 // loop_footer
    %s14 = sadd.s32 1, %s10
  $region7: #{dice_loss.1} parent=0 // loop_footer_branch
    %9 = sbr.rel target = $region3
  $region8: #{dice_loss.1} parent=0 // loop_exit
    _

</llo_original>
